<compile_context>
chip_gen: v7x
topology: tpu7x:2x2x1
jax: 0.10.0
libtpu: 0.0.40
codegen_flags: <defaults>
</compile_context>

<pallas_src>
import functools

import jax
import jax.numpy as jnp
from jax.experimental import pallas as pl
from jax.experimental.pallas import tpu as pltpu

LANE = 128
SUBLANE = 8


def _lbhinge_kernel(pred_ref, label_ref, partial_ref, *, threshold, rows_valid, ragged):
    i = pl.program_id(1)

    @pl.when(i == 0)
    def _():
        partial_ref[...] = jnp.zeros_like(partial_ref)

    pred = pred_ref[...].astype(jnp.float32)
    label = label_ref[...].astype(jnp.float32)

    # Lower-bound hinge: for labels below the threshold only positive
    # predictions are penalized, and the regression target is 0.
    neg = label < jnp.float32(threshold)
    pred_h = jnp.where(neg, jnp.maximum(pred, 0.0), pred)
    target = jnp.where(neg, 0.0, label)
    diff = pred_h - target
    sq = diff * diff

    if ragged:
        # Mask rows lying beyond the real slab (partial edge block or a
        # duplicated clamped chunk): they must contribute exactly 0.
        tr = sq.shape[0]
        chunk = pl.program_id(0) * pl.num_programs(1) + i
        row_idx = chunk * tr + jax.lax.broadcasted_iota(jnp.int32, sq.shape, 0)
        sq = jnp.where(row_idx < rows_valid, sq, 0.0)

    # Per-lane partial sums only: fold the tile's sublane-blocks onto a single
    # (8, 128) vreg footprint with pure VPU adds.  The expensive cross-lane
    # reduction is deferred to the wrapper epilogue (done once, not per step).
    tr = sq.shape[0]
    partial_ref[...] += sq.reshape(tr // SUBLANE, SUBLANE, LANE).sum(axis=0)[None]


def lbhinge_loss(prediction, label, threshold=-100.0, clip=None,
                 tile_rows=4096, num_splits=2):
    """LBHinge forward (MSE error metric, 'mean' reduction). Returns scalar f32."""
    assert prediction.shape == label.shape
    n = int(prediction.size)
    assert n > 0

    # Lane-dense (rows, 128) view.  Only copy (zero-pad) when numel is not a
    # multiple of 128 or the slab would be shorter than one sublane tile;
    # zero padding contributes exactly 0 to the hinge-MSE sum.
    rows = max(pl.cdiv(n, LANE), SUBLANE)
    if rows * LANE != n:
        pad = rows * LANE - n
        pred2 = jnp.pad(prediction.reshape(-1), (0, pad)).reshape(rows, LANE)
        label2 = jnp.pad(label.reshape(-1), (0, pad)).reshape(rows, LANE)
    else:
        pred2 = prediction.reshape(rows, LANE)
        label2 = label.reshape(rows, LANE)

    # Row tile: multiple of 8 sublanes, never taller than the slab.
    tr = max(SUBLANE, (min(int(tile_rows), rows) // SUBLANE) * SUBLANE)

    total_chunks = pl.cdiv(rows, tr)
    ns = max(1, min(int(num_splits), total_chunks))          # parallel splits
    cps = pl.cdiv(total_chunks, ns)                          # chunks per split

    # Does any grid step touch rows past the real slab?  If so, mask in-kernel.
    ragged = ns * cps * tr != rows
    clamp = ns * cps > total_chunks

    def in_map(p, i):
        c = p * cps + i
        if clamp:
            # Chunks past the end re-read the last valid chunk; their
            # (logically out-of-range) rows are masked to zero in the kernel.
            c = jnp.minimum(c, total_chunks - 1)
        return (c, 0)

    kernel = functools.partial(
        _lbhinge_kernel,
        threshold=float(threshold),
        rows_valid=rows,
        ragged=bool(ragged),
    )

    partials = pl.pallas_call(
        kernel,
        out_shape=jax.ShapeDtypeStruct((ns, SUBLANE, LANE), jnp.float32),
        grid_spec=pltpu.PrefetchScalarGridSpec(
            num_scalar_prefetch=0,
            grid=(ns, cps),
            in_specs=[
                pl.BlockSpec((tr, LANE), in_map),
                pl.BlockSpec((tr, LANE), in_map),
            ],
            out_specs=pl.BlockSpec((1, SUBLANE, LANE), lambda p, i: (p, 0, 0)),
        ),
        compiler_params=pltpu.CompilerParams(
            dimension_semantics=("parallel", "arbitrary"),
            vmem_limit_bytes=32 * 1024 * 1024,
        ),
    )(pred2, label2)

    # Epilogue: one cross-lane reduction + mean (+ optional clip) on a tiny
    # (num_splits, 8, 128) array.
    loss = jnp.sum(partials) / jnp.float32(n)
    if clip is not None:
        loss = jnp.minimum(loss, jnp.float32(clip))
    return loss


def _lbhinge_ref(prediction, label, threshold=-100.0, clip=None):
    """Pure-JAX reference mirroring the PyTorch module (MSELoss, mean reduction)."""
    prediction = prediction.astype(jnp.float32)
    label = label.astype(jnp.float32)
    neg = (label < threshold).astype(jnp.float32)
    pos = 1.0 - neg
    pred = neg * jnp.maximum(prediction, 0.0) + pos * prediction
    loss = jnp.mean((pred - pos * label) ** 2)
    if clip is not None:
        loss = jnp.minimum(loss, jnp.float32(clip))
    return loss


if __name__ == "__main__":
    key = jax.random.PRNGKey(0)

    # (shape, dtype, threshold, clip, tile_rows)
    tests = [
        # NCHW score map, 128-aligned, single tile -- the canonical case.
        ((2, 4, 16, 16), jnp.float32, -100.0, None, 4096),
        # rows=13: no wrapper pad, partial edge block + 2-way parallel split.
        ((1, 13, 8, 16), jnp.float32, -100.0, None, 4096),
        # rows=17, tile_rows=8: 3 chunks over 2 splits -> clamped duplicate chunk.
        ((1, 17, 8, 16), jnp.float32, -100.0, None, 8),
        # numel not a multiple of 128 -> minimal zero-pad path.
        ((2, 3, 5, 7), jnp.float32, -100.0, None, 4096),
        # bf16 pass-through (cast in-kernel) + clip.
        ((2, 4, 16, 16), jnp.bfloat16, -100.0, 0.5, 4096),
    ]

    for idx, (shape, dtype, thr, clip, trows) in enumerate(tests):
        k1, k2 = jax.random.split(jax.random.fold_in(key, idx))
        prediction = jax.random.normal(k1, shape, dtype=jnp.float32).astype(dtype)
        # Scale labels so some fall below the default threshold (-100) and the
        # hinge (negative-mask) path is exercised.
        label = (200.0 * jax.random.normal(k2, shape, dtype=jnp.float32)).astype(dtype)

        loss = jax.block_until_ready(
            lbhinge_loss(prediction, label, threshold=thr, clip=clip, tile_rows=trows)
        )
        ref = jax.block_until_ready(
            _lbhinge_ref(prediction, label, threshold=thr, clip=clip)
        )
        assert jnp.allclose(loss, ref, rtol=1e-5, atol=1e-5), (shape, dtype, loss, ref)

    print("KERNEL_OK")
</pallas_src>

<mosaic_0001>
module attributes {stable_mosaic.version = 11 : i64} {
  func.func @_lbhinge_kernel(%arg0: i32, %arg1: i32, %arg2: memref<16x128xf32, #tpu.memory_space<vmem>>, %arg3: memref<16x128xf32, #tpu.memory_space<vmem>>, %arg4: memref<1x8x128xf32, #tpu.memory_space<vmem>>) attributes {dimension_semantics = [#tpu.dimension_semantics<parallel>, #tpu.dimension_semantics<arbitrary>], iteration_bounds = array<i64: 1, 1>, scalar_prefetch = 0 : i64, scratch_operands = 0 : i64, tpu.core_type = #tpu.core_type<tc>, window_params = [{transform_indices = @transform_0, window_bounds = array<i64: 16, 128>}, {transform_indices = @transform_1, window_bounds = array<i64: 16, 128>}, {transform_indices = @transform_2, window_bounds = array<i64: 1, 8, 128>}]} {
    %c0_i32 = arith.constant 0 : i32
    %0 = arith.cmpi eq, %arg1, %c0_i32 : i32
    %1 = arith.extui %0 : i1 to i32
    %c0_i32_0 = arith.constant 0 : i32
    %2 = arith.cmpi ne, %1, %c0_i32_0 : i32
    scf.if %2 {
      %cst_13 = arith.constant 0.000000e+00 : f32
      %20 = vector.broadcast %cst_13 : f32 to vector<1x8x128xf32>
      %c0_14 = arith.constant 0 : index
      %c0_15 = arith.constant 0 : index
      %c0_16 = arith.constant 0 : index
      %21 = vector.load %arg4[%c0_14, %c0_15, %c0_16] : memref<1x8x128xf32, #tpu.memory_space<vmem>>, vector<1x8x128xf32>
      tpu.vector_store %arg4[%c0_14, %c0_15, %c0_16], %20 {strides = array<i32>} : memref<1x8x128xf32, #tpu.memory_space<vmem>>, vector<1x8x128xf32>,
    } else {
    }
    %c0 = arith.constant 0 : index
    %c0_1 = arith.constant 0 : index
    %3 = vector.load %arg2[%c0, %c0_1] : memref<16x128xf32, #tpu.memory_space<vmem>>, vector<16x128xf32>
    %c0_2 = arith.constant 0 : index
    %c0_3 = arith.constant 0 : index
    %4 = vector.load %arg3[%c0_2, %c0_3] : memref<16x128xf32, #tpu.memory_space<vmem>>, vector<16x128xf32>
    %cst = arith.constant -1.000000e+02 : f32
    %5 = vector.broadcast %cst : f32 to vector<16x128xf32>
    %6 = arith.cmpf olt, %4, %5 : vector<16x128xf32>
    %cst_4 = arith.constant 0.000000e+00 : f32
    %7 = vector.broadcast %cst_4 : f32 to vector<16x128xf32>
    %8 = arith.maximumf %3, %7 : vector<16x128xf32>
    %9 = arith.select %6, %8, %3 : vector<16x128xi1>, vector<16x128xf32>
    %cst_5 = arith.constant 0.000000e+00 : f32
    %10 = vector.broadcast %cst_5 : f32 to vector<16x128xf32>
    %11 = arith.select %6, %10, %4 : vector<16x128xi1>, vector<16x128xf32>
    %12 = arith.subf %9, %11 : vector<16x128xf32>
    %13 = arith.mulf %12, %12 : vector<16x128xf32>
    %c0_6 = arith.constant 0 : index
    %c0_7 = arith.constant 0 : index
    %c0_8 = arith.constant 0 : index
    %14 = vector.load %arg4[%c0_6, %c0_7, %c0_8] : memref<1x8x128xf32, #tpu.memory_space<vmem>>, vector<1x8x128xf32>
    %15 = vector.shape_cast %13 : vector<16x128xf32> to vector<2x8x128xf32>
    %cst_9 = arith.constant dense<0.000000e+00> : vector<8x128xf32>
    %16 = vector.multi_reduction <add>, %15, %cst_9 [0] : vector<2x8x128xf32> to vector<8x128xf32>
    %17 = vector.shape_cast %16 : vector<8x128xf32> to vector<1x8x128xf32>
    %18 = arith.addf %14, %17 : vector<1x8x128xf32>
    %c0_10 = arith.constant 0 : index
    %c0_11 = arith.constant 0 : index
    %c0_12 = arith.constant 0 : index
    %19 = vector.load %arg4[%c0_10, %c0_11, %c0_12] : memref<1x8x128xf32, #tpu.memory_space<vmem>>, vector<1x8x128xf32>
    tpu.vector_store %arg4[%c0_10, %c0_11, %c0_12], %18 {strides = array<i32>} : memref<1x8x128xf32, #tpu.memory_space<vmem>>, vector<1x8x128xf32>,
    return
  }
  func.func @transform_0(%arg0: i32, %arg1: i32) -> (i32, i32) {
    %c1_i32 = arith.constant 1 : i32
    %0 = arith.muli %arg0, %c1_i32 : i32
    %1 = arith.addi %0, %arg1 : i32
    %c0_i32 = arith.constant 0 : i32
    %c0_i32_0 = arith.constant 0 : i32
    return %1, %c0_i32 : i32, i32
  }
  func.func @transform_1(%arg0: i32, %arg1: i32) -> (i32, i32) {
    %c1_i32 = arith.constant 1 : i32
    %0 = arith.muli %arg0, %c1_i32 : i32
    %1 = arith.addi %0, %arg1 : i32
    %c0_i32 = arith.constant 0 : i32
    %c0_i32_0 = arith.constant 0 : i32
    return %1, %c0_i32 : i32, i32
  }
  func.func @transform_2(%arg0: i32, %arg1: i32) -> (i32, i32, i32) {
    %c0_i32 = arith.constant 0 : i32
    %c0_i32_0 = arith.constant 0 : i32
    %c0_i32_1 = arith.constant 0 : i32
    return %arg0, %c0_i32, %c0_i32_0 : i32, i32, i32
  }
}

</mosaic_0001>

<llo_original>
// kernel: tpu_custom_call.1
$region0: #{tpu_custom_call.1}
  #allocation0 [shape = 'u32[]', space=smem, size = 0x4, offset = 0x4, fixed_abs, tag = 'smem constant byte address 0x4 - core index']
  #allocation1 [shape = 'u32[144,128]{1,0:T(1,128)}', space=vmem, size = 0x12000, scoped, tag = 'internal scratch']
  %s0 = inlined_call_operand.hbm [shape: f32[16,128], index: 0, kind: input, shape index: {}]
  %s1 = inlined_call_operand.hbm [shape: f32[16,128], index: 1, kind: input, shape index: {}]
  %s2 = inlined_call_operand.hbm [shape: f32[1,8,128], index: 2, kind: output, shape index: {}]
  %s3 = sld [smem:[#allocation0]]
  $region30: #{tpu_custom_call.1} parent=0
    _
  %s5 = ssub.s32 1, %s3
  %s6 = scalar_select 0, %s5, %s3
  $region1: #{tpu_custom_call.1} parent=0
    #allocation2 [shape = 'u8[8192]{0}', space=vmem, size = 0x2000, scoped, tag = 'input window, operand 0, single buffered']
    #allocation3 [shape = 's32[1]{0}', space=sflag, size = 0x4, scoped, tag = 'scoped memory for tpu_custom_call.1']
    #allocation4 [shape = 's32[1]{0}', space=sflag, size = 0x4, scoped, tag = 'scoped memory for tpu_custom_call.1']
    #allocation5 [shape = 'u8[8192]{0}', space=vmem, size = 0x2000, scoped, tag = 'input window, operand 1, single buffered']
    #allocation6 [shape = 's32[1]{0}', space=sflag, size = 0x4, scoped, tag = 'scoped memory for tpu_custom_call.1']
    #allocation7 [shape = 'u8[4096]{0}', space=vmem, size = 0x1000, scoped, tag = 'output window, operand 0, single buffered']
    %7 = vsyncpa [#allocation3], 0
    %8 = vsyncpa [#allocation6], 0
    %9 = vsyncpa [#allocation4], 0
    // Predicated region
    $region2: #{tpu_custom_call.1} parent=1 // pred_check
      _
    $region3: #{tpu_custom_call.1} parent=1 // pred_check_branch
      %11 = sbr.rel (0) target = $region5
    $region4: #{tpu_custom_call.1} parent=1 // pred_region
      %s12 = sadd.s32 0, 0
      %s13 = smul.u32 2, %s12
      %s15 = ssub.s32 256, 256
      %16 = vsyncadd [#allocation3], %s15
      %s17 = smul.addr %s13, 128
      %s18 = scalar_lea.hbm %s0, %s17
      %s19 = sshll.u32 [#allocation2], 4
      %s20 = int_to_ptr.vmem [resolvable:$true] %s19
      %25 = dma.hbm_to_vmem [thread:$0]  %s18, 256, %s20, [#allocation3], 128, 128, 8
    $region5: #{tpu_custom_call.1} parent=1 // pred_fallthru
      _
    // Predicated region
    $region6: #{tpu_custom_call.1} parent=1 // pred_check
      _
    $region7: #{tpu_custom_call.1} parent=1 // pred_check_branch
      %27 = sbr.rel (0) target = $region9
    $region8: #{tpu_custom_call.1} parent=1 // pred_region
      %s28 = sadd.s32 0, 0
      %s29 = smul.u32 2, %s28
      %s31 = ssub.s32 256, 256
      %32 = vsyncadd [#allocation6], %s31
      %s33 = smul.addr %s29, 128
      %s34 = scalar_lea.hbm %s1, %s33
      %s35 = sshll.u32 [#allocation5], 4
      %s36 = int_to_ptr.vmem [resolvable:$true] %s35
      %41 = dma.hbm_to_vmem [thread:$0]  %s34, 256, %s36, [#allocation6], 128, 128, 8
    $region9: #{tpu_custom_call.1} parent=1 // pred_fallthru
      _
    // Predicated region
    $region10: #{tpu_custom_call.1} parent=1 // pred_check
      _
    $region11: #{tpu_custom_call.1} parent=1 // pred_check_branch
      %43 = sbr.rel (0) target = $region13
    $region12: #{tpu_custom_call.1} parent=1 // pred_region
      %44 = dma.done [#allocation3], 256
    $region13: #{tpu_custom_call.1} parent=1 // pred_fallthru
      _
    // Predicated region
    $region14: #{tpu_custom_call.1} parent=1 // pred_check
      _
    $region15: #{tpu_custom_call.1} parent=1 // pred_check_branch
      %46 = sbr.rel (0) target = $region17
    $region16: #{tpu_custom_call.1} parent=1 // pred_region
      %47 = dma.done [#allocation6], 256
    $region17: #{tpu_custom_call.1} parent=1 // pred_fallthru
      _
    %s48 = sadd.s32 0, 0
    %s49 = smul.u32 2, %s48
    %s50 = sadd.s32 0, 0
    %s51 = smul.u32 2, %s50
    %p52 = scmp.eq.s32.totalorder 0, 0
    // Predicated region
    $region18: #{tpu_custom_call.1} parent=1 // pred_check
      %p53 = pneg %p52
    $region19: #{tpu_custom_call.1} parent=1 // pred_check_branch
      %55 = sbr.rel (%p53) target = $region21
    $region20: #{tpu_custom_call.1} parent=1 // pred_region
      %56 = vst [vmem:[#allocation7] sm:$0xff] 0.0
    $region21: #{tpu_custom_call.1} parent=1 // pred_fallthru
      _
    %v57 = vld [vmem:[#allocation2] sm:$0xff]
    %v58 = vld [vmem:[#allocation2 + $0x8] sm:$0xff]
    %v59 = vld [vmem:[#allocation5] sm:$0xff]
    %v60 = vld [vmem:[#allocation5 + $0x8] sm:$0xff]
    %vm61 = vcmp.lt.f32.partialorder %v59, -100.0
    %vm62 = vcmp.lt.f32.partialorder %v60, -100.0
    %v63 = vmax.f32 %v57, 0.0
    %v64 = vmax.f32 %v58, 0.0
    %v65 = vsel %vm61, %v63, %v57
    %v66 = vsel %vm62, %v64, %v58
    %v67 = vsel %vm61, 0.0, %v59
    %v68 = vsel %vm62, 0.0, %v60
    %v69 = vsub.f32 %v65, %v67
    %v70 = vsub.f32 %v66, %v68
    %v71 = vmul.f32 %v69, %v69
    %v72 = vmul.f32 %v70, %v70
    %v73 = vld [vmem:[#allocation7] sm:$0xff]
    %v74 = vadd.f32 %v71, %v72
    %v75 = vadd.f32 %v73, %v74
    %76 = vst [vmem:[#allocation7] sm:$0xff] %v75
    // Predicated region
    $region22: #{tpu_custom_call.1} parent=1 // pred_check
      _
    $region23: #{tpu_custom_call.1} parent=1 // pred_check_branch
      %78 = sbr.rel (0) target = $region25
    $region24: #{tpu_custom_call.1} parent=1 // pred_region
      %s80 = ssub.s32 128, 128
      %81 = vsyncadd [#allocation4], %s80
      %s83 = sshll.u32 [#allocation7], 4
      %s84 = int_to_ptr.vmem [resolvable:$true] %s83
      %86 = dma.vmem_to_hbm [thread:$0]  %s84, 128, %s2, [#allocation4]
    $region25: #{tpu_custom_call.1} parent=1 // pred_fallthru
      _
    // Predicated region
    $region26: #{tpu_custom_call.1} parent=1 // pred_check
      _
    $region27: #{tpu_custom_call.1} parent=1 // pred_check_branch
      %88 = sbr.rel (0) target = $region29
    $region28: #{tpu_custom_call.1} parent=1 // pred_region
      %89 = dma.done [#allocation4], 128
    $region29: #{tpu_custom_call.1} parent=1 // pred_fallthru
      _
    %90 = vsyncpa [#allocation3], 1
    %91 = vsyncpa [#allocation6], 1
    %92 = vsyncpa [#allocation4], 1

</llo_original>
